<compile_context>
chip_gen: v7x
topology: tpu7x:2x2x1
jax: 0.10.0
libtpu: 0.0.40
codegen_flags: <defaults>
</compile_context>

<pallas_src>
import functools

import jax
import jax.numpy as jnp
from jax.experimental import pallas as pl
from jax.experimental.pallas import tpu as pltpu


_MAX_BLOCK_R = 2048      # (2048, 128) f32 = 1 MiB per buffer per input
_NUM_CORE_SPLITS = 2     # v7x has 2 TensorCores; sequential no-op on v5e/v6e


# ----------------------------- Pallas kernel --------------------------------
def _l1_partial_kernel(pred_ref, gt_ref, out_ref, *, rows, block_r,
                       blocks_per_core):
    """Accumulates per-lane sums of |pred - gt| into the resident out block."""
    c = pl.program_id(0)        # core-split axis (parallel)
    i = pl.program_id(1)        # block index within this core's range (arbitrary)

    @pl.when(i == 0)
    def _():
        out_ref[...] = jnp.zeros_like(out_ref)

    # Cast to f32 in-kernel; inputs stay in their native dtype in HBM.
    diff = pred_ref[...].astype(jnp.float32) - gt_ref[...].astype(jnp.float32)
    absd = jnp.abs(diff)

    # Mask rows past the end of the array (ragged last block / clamped repeat
    # blocks on the second core) so they contribute exactly 0.
    b = c * blocks_per_core + i                     # global (unclamped) block
    valid_rows = rows - b * block_r
    row_idx = jax.lax.broadcasted_iota(jnp.int32, absd.shape, 0)
    absd = jnp.where(row_idx < valid_rows, absd, 0.0)

    # Sublane-only reduce each step; the cross-lane reduce is hoisted out of
    # the loop (done once in the wrapper on the (2*8, 128) partials).
    out_ref[0:1, :] += jnp.sum(absd, axis=0, keepdims=True)


def _level_abs_sum(pred, gt):
    """sum(|pred - gt|) over all elements of one pyramid level (f32 scalar)."""
    assert pred.shape == gt.shape
    numel = pred.size
    p = pred.reshape(-1)
    g = gt.reshape(-1)
    rem = numel % 128
    if rem:
        # Rare fallback (element count not lane-aligned): zero-pad the tail
        # (|0 - 0| = 0). Typical image pyramids take the copy-free path above.
        pad = 128 - rem
        p = jnp.pad(p, (0, pad))
        g = jnp.pad(g, (0, pad))
    rows = p.size // 128
    p2 = p.reshape(rows, 128)
    g2 = g.reshape(rows, 128)

    # Largest block that fits VMEM comfortably; if the level fits in a single
    # block, use the full extent (allowed even when rows % 8 != 0 because the
    # block equals the full array dim).
    block_r = rows if rows < _MAX_BLOCK_R else _MAX_BLOCK_R
    nblocks = pl.cdiv(rows, block_r)
    blocks_per_core = pl.cdiv(nblocks, _NUM_CORE_SPLITS)

    def in_idx(c, i):
        # Clamp so the (possibly empty) tail of the second core's range keeps
        # pointing at the last real block: no extra DMA (same index as the
        # previous step) and the kernel masks it to zero.
        return (jnp.minimum(c * blocks_per_core + i, nblocks - 1), 0)

    kernel = functools.partial(
        _l1_partial_kernel, rows=rows, block_r=block_r,
        blocks_per_core=blocks_per_core)

    partials = pl.pallas_call(
        kernel,
        out_shape=jax.ShapeDtypeStruct((_NUM_CORE_SPLITS * 8, 128),
                                       jnp.float32),
        grid_spec=pltpu.PrefetchScalarGridSpec(
            num_scalar_prefetch=0,
            grid=(_NUM_CORE_SPLITS, blocks_per_core),
            in_specs=[
                pl.BlockSpec((block_r, 128), in_idx),
                pl.BlockSpec((block_r, 128), in_idx),
            ],
            out_specs=pl.BlockSpec((8, 128), lambda c, i: (c, 0)),
        ),
        compiler_params=pltpu.CompilerParams(
            dimension_semantics=("parallel", "arbitrary")),
    )(p2, g2)
    # Single cross-lane (+ cross-core) reduce of the 2*8*128 partial sums.
    return jnp.sum(partials)


# ------------------------------- wrappers ------------------------------------
def mean_l1(pred, gt, mask=None):
    """F.l1_loss(pred, gt, reduction='mean') (optionally masked)."""
    if mask is not None:
        pred = pred * mask
        gt = gt * mask
    return _level_abs_sum(pred, gt) / jnp.float32(pred.size)


class TotalLoss:
    """JAX/Pallas port of DBVI_2x totalLoss (mean L1 summed over levels)."""

    # TODO(synk): forward-only; add a custom_vjp (sign kernel) if this loss
    # must be differentiated without relying on autodiff-through-pallas_call.

    def __init__(self):
        self.scale = [1, 1, 1, 1, 1, 1]
        self.lossNames = ["l1"]
        self.lossDict = {}

    def __call__(self, rgbs, gts):
        self.lossDict.clear()
        if len(rgbs) > 1:
            assert len(self.scale) == len(rgbs) and len(rgbs) == len(gts)
            scales = self.scale
        else:
            scales = self.scale[-len(rgbs):]
        l1loss = jnp.float32(0.0)
        for scale, rgb, gt in zip(scales, rgbs, gts):
            # gt.detach() -> stop_gradient; the trailing .mean() on an
            # already-scalar mean loss is a no-op for the forward value.
            l1loss = l1loss + mean_l1(rgb, jax.lax.stop_gradient(gt)) * scale * 1
        lossSum = l1loss
        self.lossDict.setdefault("l1", jax.lax.stop_gradient(l1loss))
        self.lossDict.setdefault("Total", jax.lax.stop_gradient(lossSum))
        return lossSum


# -------------------------------- main ---------------------------------------
if __name__ == "__main__":
    key = jax.random.PRNGKey(0)

    # 6-level pyramid of NCHW predictions / ground truths (batch=2, channels=3).
    spatial = [32, 32, 16, 16, 8, 8]
    rgbs, gts = [], []
    for s in spatial:
        key, k1, k2 = jax.random.split(key, 3)
        rgbs.append(jax.random.normal(k1, (2, 3, s, s), dtype=jnp.float32))
        gts.append(jax.random.normal(k2, (2, 3, s, s), dtype=jnp.float32))

    loss_mod = TotalLoss()
    loss = loss_mod(rgbs, gts)
    loss = jax.block_until_ready(loss)

    # Pure-JAX reference for sanity.
    ref = sum(jnp.mean(jnp.abs(r - g)) for r, g in zip(rgbs, gts))
    assert jnp.allclose(loss, ref, rtol=1e-5, atol=1e-5), (loss, ref)

    print("KERNEL_OK")
</pallas_src>

<mosaic_0001>
module attributes {stable_mosaic.version = 11 : i64} {
  func.func @_l1_partial_kernel(%arg0: i32, %arg1: i32, %arg2: memref<48x128xf32, #tpu.memory_space<vmem>>, %arg3: memref<48x128xf32, #tpu.memory_space<vmem>>, %arg4: memref<8x128xf32, #tpu.memory_space<vmem>>) attributes {dimension_semantics = [#tpu.dimension_semantics<parallel>, #tpu.dimension_semantics<arbitrary>], iteration_bounds = array<i64: 2, 1>, scalar_prefetch = 0 : i64, scratch_operands = 0 : i64, tpu.core_type = #tpu.core_type<tc>, window_params = [{transform_indices = @transform_0, window_bounds = array<i64: 48, 128>}, {transform_indices = @transform_1, window_bounds = array<i64: 48, 128>}, {transform_indices = @transform_2, window_bounds = array<i64: 8, 128>}]} {
    %c0_i32 = arith.constant 0 : i32
    %0 = arith.cmpi eq, %arg1, %c0_i32 : i32
    %1 = arith.extui %0 : i1 to i32
    %c0_i32_0 = arith.constant 0 : i32
    %2 = arith.cmpi ne, %1, %c0_i32_0 : i32
    scf.if %2 {
      %cst_10 = arith.constant 0.000000e+00 : f32
      %21 = vector.broadcast %cst_10 : f32 to vector<8x128xf32>
      %c0_11 = arith.constant 0 : index
      %c0_12 = arith.constant 0 : index
      %22 = vector.load %arg4[%c0_11, %c0_12] : memref<8x128xf32, #tpu.memory_space<vmem>>, vector<8x128xf32>
      tpu.vector_store %arg4[%c0_11, %c0_12], %21 {strides = array<i32>} : memref<8x128xf32, #tpu.memory_space<vmem>>, vector<8x128xf32>,
    } else {
    }
    %c0 = arith.constant 0 : index
    %c0_1 = arith.constant 0 : index
    %3 = vector.load %arg2[%c0, %c0_1] : memref<48x128xf32, #tpu.memory_space<vmem>>, vector<48x128xf32>
    %c0_2 = arith.constant 0 : index
    %c0_3 = arith.constant 0 : index
    %4 = vector.load %arg3[%c0_2, %c0_3] : memref<48x128xf32, #tpu.memory_space<vmem>>, vector<48x128xf32>
    %5 = arith.subf %3, %4 : vector<48x128xf32>
    %6 = math.absf %5 : vector<48x128xf32>
    %c1_i32 = arith.constant 1 : i32
    %7 = arith.muli %arg0, %c1_i32 : i32
    %8 = arith.addi %7, %arg1 : i32
    %c48_i32 = arith.constant 48 : i32
    %9 = arith.muli %8, %c48_i32 : i32
    %c48_i32_4 = arith.constant 48 : i32
    %10 = arith.subi %c48_i32_4, %9 : i32
    %11 = tpu.iota {dimensions = array<i32: 0>} : vector<48x128xi32>
    %12 = vector.broadcast %10 : i32 to vector<48x128xi32>
    %13 = arith.cmpi slt, %11, %12 : vector<48x128xi32>
    %cst = arith.constant 0.000000e+00 : f32
    %14 = vector.broadcast %cst : f32 to vector<48x128xf32>
    %15 = arith.select %13, %6, %14 : vector<48x128xi1>, vector<48x128xf32>
    %c0_5 = arith.constant 0 : index
    %c0_6 = arith.constant 0 : index
    %16 = vector.load %arg4[%c0_5, %c0_6] : memref<8x128xf32, #tpu.memory_space<vmem>>, vector<1x128xf32>
    %cst_7 = arith.constant dense<0.000000e+00> : vector<128xf32>
    %17 = vector.multi_reduction <add>, %15, %cst_7 [0] : vector<48x128xf32> to vector<128xf32>
    %18 = vector.shape_cast %17 : vector<128xf32> to vector<1x128xf32>
    %19 = arith.addf %16, %18 : vector<1x128xf32>
    %c0_8 = arith.constant 0 : index
    %c0_9 = arith.constant 0 : index
    %20 = vector.load %arg4[%c0_8, %c0_9] : memref<8x128xf32, #tpu.memory_space<vmem>>, vector<1x128xf32>
    tpu.vector_store %arg4[%c0_8, %c0_9], %19 {strides = array<i32>} : memref<8x128xf32, #tpu.memory_space<vmem>>, vector<1x128xf32>,
    return
  }
  func.func @transform_0(%arg0: i32, %arg1: i32) -> (i32, i32) {
    %c1_i32 = arith.constant 1 : i32
    %0 = arith.muli %arg0, %c1_i32 : i32
    %1 = arith.addi %0, %arg1 : i32
    %c0_i32 = arith.constant 0 : i32
    %2 = arith.minsi %1, %c0_i32 : i32
    %c0_i32_0 = arith.constant 0 : i32
    %c0_i32_1 = arith.constant 0 : i32
    return %2, %c0_i32_0 : i32, i32
  }
  func.func @transform_1(%arg0: i32, %arg1: i32) -> (i32, i32) {
    %c1_i32 = arith.constant 1 : i32
    %0 = arith.muli %arg0, %c1_i32 : i32
    %1 = arith.addi %0, %arg1 : i32
    %c0_i32 = arith.constant 0 : i32
    %2 = arith.minsi %1, %c0_i32 : i32
    %c0_i32_0 = arith.constant 0 : i32
    %c0_i32_1 = arith.constant 0 : i32
    return %2, %c0_i32_0 : i32, i32
  }
  func.func @transform_2(%arg0: i32, %arg1: i32) -> (i32, i32) {
    %c0_i32 = arith.constant 0 : i32
    %c0_i32_0 = arith.constant 0 : i32
    return %arg0, %c0_i32 : i32, i32
  }
}

</mosaic_0001>

<llo_original>
// kernel: tpu_custom_call.1
$region0: #{tpu_custom_call.1}
  #allocation0 [shape = 'u32[]', space=smem, size = 0x4, offset = 0x4, fixed_abs, tag = 'smem constant byte address 0x4 - core index']
  #allocation1 [shape = 'u32[144,128]{1,0:T(1,128)}', space=vmem, size = 0x12000, scoped, tag = 'internal scratch']
  %s0 = inlined_call_operand.hbm [shape: f32[48,128], index: 0, kind: input, shape index: {}]
  %s1 = inlined_call_operand.hbm [shape: f32[48,128], index: 1, kind: input, shape index: {}]
  %s2 = inlined_call_operand.hbm [shape: f32[16,128], index: 2, kind: output, shape index: {}]
  %s3 = sld [smem:[#allocation0]]
  $region53: #{tpu_custom_call.1} parent=0
    _
  %s5 = ssub.s32 1, %s3
  %s6 = scalar_select 0, %s5, %s3
  $region1: #{tpu_custom_call.1} parent=0
    #allocation2 [shape = 'u8[49152]{0}', space=vmem, size = 0xc000, scoped, tag = 'input window, operand 0']
    #allocation3 [shape = 's32[2]{0}', space=sflag, size = 0x8, scoped, tag = 'scoped memory for tpu_custom_call.1']
    #allocation4 [shape = 's32[2]{0}', space=sflag, size = 0x8, scoped, tag = 'scoped memory for tpu_custom_call.1']
    #allocation5 [shape = 'u8[49152]{0}', space=vmem, size = 0xc000, scoped, tag = 'input window, operand 1']
    #allocation6 [shape = 's32[2]{0}', space=sflag, size = 0x8, scoped, tag = 'scoped memory for tpu_custom_call.1']
    #allocation7 [shape = 'u8[8192]{0}', space=vmem, size = 0x2000, scoped, tag = 'output window, operand 0']
    %7 = vsyncpa [#allocation3], 0
    %s8 = scalar_lea.sflag [#allocation3], 1
    %9 = vsyncpa %s8, 0
    %10 = vsyncpa [#allocation6], 0
    %s11 = scalar_lea.sflag [#allocation6], 1
    %12 = vsyncpa %s11, 0
    %13 = vsyncpa [#allocation4], 0
    %s14 = scalar_lea.sflag [#allocation4], 1
    %15 = vsyncpa %s14, 0
    loop: start=0, step=1, limit=4
    $region2: #{tpu_custom_call.1} parent=1 // loop_pre_header
      _
    $region3: #{tpu_custom_call.1} parent=1 // loop_header
      %s17 = sphi 0, %s21
      %p18 = scmp.ge.s32.totalorder %s17, 4
      %s24 = sphi 0, %s36
      %s25 = sphi 0, %s32
      %s26 = sphi 0, %s24
      %s27 = sphi 0, %s25
      %s28 = sphi 0, %s26
      %s29 = sphi 0, %s27
      %s45 = sphi 0, %s47
      %s48 = sphi 0, %s45
      %s49 = sphi 0, %s48
      %s65 = sphi 0, %s49
      %s77 = sphi 0, %s79
      %s80 = sphi 0, %s77
      %s81 = sphi 0, %s80
      %s97 = sphi 0, %s81
      %s103 = sphi 0, %s105
      %s106 = sphi 0, %s103
      %s107 = sphi 0, %s106
      %s123 = sphi 0, %s107
    $region4: #{tpu_custom_call.1} parent=1 // loop_header_branch
      %20 = sbr.rel (%p18) target = $region8
    $region5: #{tpu_custom_call.1} parent=1 // loop_body
      %s22 = ssub.s32 %s17, 1
      %s23 = ssub.s32 %s17, 2
      %s30 = sadd.s32 1, %s25
      %p31 = scmp.ge.s32.totalorder %s30, 1
      %s32 = scalar_select %p31, 0, %s30
      %s33 = sadd.s32 1, %s24
      %s34 = scalar_select %p31, %s33, %s24
      %p35 = scmp.ge.s32.totalorder %s34, 2
      %s36 = scalar_select %p35, 0, %s34
      %s37 = sadd.s32 %s24, %s25
      %p38 = scmp.lt.s32.totalorder %s37, 0
      %s39 = scalar_select %p38, %s37, 0
      %s40 = sadd.s32 %s36, %s32
      %p41 = scmp.lt.s32.totalorder %s40, 0
      %s42 = scalar_select %p41, %s40, 0
      %s43 = ssub.s32 %s39, %s42
      %p44 = scmp.eq.s32.totalorder %s43, 0
      %s46 = sadd.s32 %s45, 1
      %s47 = scalar_select %p44, %s45, %s46
      %p50 = pneg %p44
      %p51 = scmp.eq.s32.totalorder %s17, 1
      %p52 = por %p50, %p51
      %p53 = scmp.ne.s32.totalorder %s45, %s48
      %p54 = scmp.eq.s32.totalorder %s17, 0
      %p55 = por %p53, %p54
      %p56 = scmp.ne.s32.totalorder %s45, %s48
      %p57 = scmp.eq.s32.totalorder %s22, 1
      %p58 = por %p56, %p57
      %p59 = scmp.ne.s32.totalorder %s48, %s49
      %p60 = scmp.eq.s32.totalorder %s22, 0
      %p61 = por %p59, %p60
      %p62 = scmp.ne.s32.totalorder %s48, %s49
      %p63 = scmp.eq.s32.totalorder %s23, 1
      %p64 = por %p62, %p63
      %p66 = scmp.ne.s32.totalorder %s49, %s65
      %p67 = scmp.eq.s32.totalorder %s23, 0
      %p68 = por %p66, %p67
      %s69 = sadd.s32 %s24, %s25
      %p70 = scmp.lt.s32.totalorder %s69, 0
      %s71 = scalar_select %p70, %s69, 0
      %s72 = sadd.s32 %s36, %s32
      %p73 = scmp.lt.s32.totalorder %s72, 0
      %s74 = scalar_select %p73, %s72, 0
      %s75 = ssub.s32 %s71, %s74
      %p76 = scmp.eq.s32.totalorder %s75, 0
      %s78 = sadd.s32 %s77, 1
      %s79 = scalar_select %p76, %s77, %s78
      %p82 = pneg %p76
      %p83 = scmp.eq.s32.totalorder %s17, 1
      %p84 = por %p82, %p83
      %p85 = scmp.ne.s32.totalorder %s77, %s80
      %p86 = scmp.eq.s32.totalorder %s17, 0
      %p87 = por %p85, %p86
      %p88 = scmp.ne.s32.totalorder %s77, %s80
      %p89 = scmp.eq.s32.totalorder %s22, 1
      %p90 = por %p88, %p89
      %p91 = scmp.ne.s32.totalorder %s80, %s81
      %p92 = scmp.eq.s32.totalorder %s22, 0
      %p93 = por %p91, %p92
      %p94 = scmp.ne.s32.totalorder %s80, %s81
      %p95 = scmp.eq.s32.totalorder %s23, 1
      %p96 = por %p94, %p95
      %p98 = scmp.ne.s32.totalorder %s81, %s97
      %p99 = scmp.eq.s32.totalorder %s23, 0
      %p100 = por %p98, %p99
      %s101 = ssub.s32 %s24, %s36
      %p102 = scmp.eq.s32.totalorder %s101, 0
      %s104 = sadd.s32 %s103, 1
      %s105 = scalar_select %p102, %s103, %s104
      %p108 = pneg %p102
      %p109 = scmp.eq.s32.totalorder %s17, 1
      %p110 = por %p108, %p109
      %p111 = scmp.ne.s32.totalorder %s103, %s106
      %p112 = scmp.eq.s32.totalorder %s17, 0
      %p113 = por %p111, %p112
      %p114 = scmp.ne.s32.totalorder %s103, %s106
      %p115 = scmp.eq.s32.totalorder %s22, 1
      %p116 = por %p114, %p115
      %p117 = scmp.ne.s32.totalorder %s106, %s107
      %p118 = scmp.eq.s32.totalorder %s22, 0
      %p119 = por %p117, %p118
      %p120 = scmp.ne.s32.totalorder %s106, %s107
      %p121 = scmp.eq.s32.totalorder %s23, 1
      %p122 = por %p120, %p121
      %p124 = scmp.ne.s32.totalorder %s107, %s123
      %p125 = scmp.eq.s32.totalorder %s23, 0
      %p126 = por %p124, %p125
      %p127 = scmp.le.s32.totalorder 1, %s17
      %p128 = scmp.lt.s32.totalorder %s17, 3
      %p129 = pnand %p127, %p128
      %p130 = pneg %p129
      // Predicated region
      $region9: #{tpu_custom_call.1} parent=5 // pred_check
        _
      $region10: #{tpu_custom_call.1} parent=5 // pred_check_branch
        %132 = sbr.rel (%p129) target = $region12
      $region11: #{tpu_custom_call.1} parent=5 // pred_region
        %s133 = ssub.s32 %s17, 1
      $region12: #{tpu_custom_call.1} parent=5 // pred_fallthru
        _
      %p134 = scmp.lt.s32.totalorder %s17, 2
      // Predicated region
      $region13: #{tpu_custom_call.1} parent=5 // pred_check
        %p135 = pneg %p134
      $region14: #{tpu_custom_call.1} parent=5 // pred_check_branch
        %137 = sbr.rel (%p135) target = $region16
      $region15: #{tpu_custom_call.1} parent=5 // pred_region
        // Predicated region
        $region17: #{tpu_custom_call.1} parent=15 // pred_check
          %p138 = pneg %p55
        $region18: #{tpu_custom_call.1} parent=15 // pred_check_branch
          %140 = sbr.rel (%p138) target = $region20
        $region19: #{tpu_custom_call.1} parent=15 // pred_region
          %s141 = sand.u32 %s45, 1
          %s142 = scalar_lea.sflag [#allocation3], %s141
          %s143 = sand.u32 %s45, 1
          %s144 = smul.addr %s143, 48
          %s145 = scalar_lea.vmem [#allocation2], %s144
          %s146 = sadd.s32 %s24, %s25
          %p147 = scmp.lt.s32.totalorder %s146, 0
          %s148 = scalar_select %p147, %s146, 0
          %s149 = smul.u32 6, %s148
          %s151 = ssub.s32 768, 768
          %152 = vsyncadd %s142, %s151
          %s153 = smul.addr %s149, 128
          %s154 = scalar_lea.hbm %s0, %s153
          %s155 = sshll.u32 %s145, 4
          %s156 = int_to_ptr.vmem [resolvable:$true] %s155
          %161 = dma.hbm_to_vmem [thread:$0]  %s154, 768, %s156, %s142, 128, 128, 8
        $region20: #{tpu_custom_call.1} parent=15 // pred_fallthru
          _
        // Predicated region
        $region21: #{tpu_custom_call.1} parent=15 // pred_check
          %p162 = pneg %p87
        $region22: #{tpu_custom_call.1} parent=15 // pred_check_branch
          %164 = sbr.rel (%p162) target = $region24
        $region23: #{tpu_custom_call.1} parent=15 // pred_region
          %s165 = sand.u32 %s77, 1
          %s166 = scalar_lea.sflag [#allocation6], %s165
          %s167 = sand.u32 %s77, 1
          %s168 = smul.addr %s167, 48
          %s169 = scalar_lea.vmem [#allocation5], %s168
          %s170 = sadd.s32 %s24, %s25
          %p171 = scmp.lt.s32.totalorder %s170, 0
          %s172 = scalar_select %p171, %s170, 0
          %s173 = smul.u32 6, %s172
          %s175 = ssub.s32 768, 768
          %176 = vsyncadd %s166, %s175
          %s177 = smul.addr %s173, 128
          %s178 = scalar_lea.hbm %s1, %s177
          %s179 = sshll.u32 %s169, 4
          %s180 = int_to_ptr.vmem [resolvable:$true] %s179
          %185 = dma.hbm_to_vmem [thread:$0]  %s178, 768, %s180, %s166, 128, 128, 8
        $region24: #{tpu_custom_call.1} parent=15 // pred_fallthru
          _
      $region16: #{tpu_custom_call.1} parent=5 // pred_fallthru
        _
      %p186 = scmp.le.s32.totalorder 1, %s17
      %p187 = scmp.lt.s32.totalorder %s17, 3
      %p188 = pnand %p186, %p187
      %p189 = pneg %p188
      // Predicated region
      $region25: #{tpu_custom_call.1} parent=5 // pred_check
        _
      $region26: #{tpu_custom_call.1} parent=5 // pred_check_branch
        %191 = sbr.rel (%p188) target = $region28
      $region27: #{tpu_custom_call.1} parent=5 // pred_region
        %s192 = ssub.s32 %s17, 1
        %s193 = sand.u32 %s48, 1
        %s194 = scalar_lea.sflag [#allocation3], %s193
        %s195 = sand.u32 %s48, 1
        %s196 = smul.addr %s195, 48
        %s197 = scalar_lea.vmem [#allocation2], %s196
        // Predicated region
        $region29: #{tpu_custom_call.1} parent=27 // pred_check
          %p198 = pneg %p61
        $region30: #{tpu_custom_call.1} parent=27 // pred_check_branch
          %200 = sbr.rel (%p198) target = $region32
        $region31: #{tpu_custom_call.1} parent=27 // pred_region
          %201 = dma.done %s194, 768
        $region32: #{tpu_custom_call.1} parent=27 // pred_fallthru
          _
        %s202 = sand.u32 %s80, 1
        %s203 = scalar_lea.sflag [#allocation6], %s202
        %s204 = sand.u32 %s80, 1
        %s205 = smul.addr %s204, 48
        %s206 = scalar_lea.vmem [#allocation5], %s205
        // Predicated region
        $region33: #{tpu_custom_call.1} parent=27 // pred_check
          %p207 = pneg %p93
        $region34: #{tpu_custom_call.1} parent=27 // pred_check_branch
          %209 = sbr.rel (%p207) target = $region36
        $region35: #{tpu_custom_call.1} parent=27 // pred_region
          %210 = dma.done %s203, 768
        $region36: #{tpu_custom_call.1} parent=27 // pred_fallthru
          _
        %s211 = sand.u32 %s48, 1
        %s212 = scalar_lea.sflag [#allocation3], %s211
        %s213 = sand.u32 %s48, 1
        %s214 = smul.addr %s213, 48
        %s215 = scalar_lea.vmem [#allocation2], %s214
        %p216 = pneg %p61
        %p217 = pneg %p58
        %s218 = sand.u32 %s80, 1
        %s219 = scalar_lea.sflag [#allocation6], %s218
        %s220 = sand.u32 %s80, 1
        %s221 = smul.addr %s220, 48
        %s222 = scalar_lea.vmem [#allocation5], %s221
        %p223 = pneg %p93
        %p224 = pneg %p90
        %p225 = pneg %p119
        %p226 = pneg %p116
        %s227 = sand.u32 %s106, 1
        %s228 = scalar_lea.sflag [#allocation4], %s227
        %s229 = sand.u32 %s106, 1
        %s230 = smul.addr %s229, 8
        %s231 = scalar_lea.vmem [#allocation7], %s230
        %s232 = sadd.s32 %s26, %s27
        %p233 = scmp.lt.s32.totalorder %s232, 0
        %s234 = scalar_select %p233, %s232, 0
        %s235 = smul.u32 6, %s234
        %s236 = sadd.s32 %s26, %s27
        %p237 = scmp.lt.s32.totalorder %s236, 0
        %s238 = scalar_select %p237, %s236, 0
        %s239 = smul.u32 6, %s238
        %p240 = scmp.eq.s32.totalorder %s27, 0
        // Predicated region
        $region37: #{tpu_custom_call.1} parent=27 // pred_check
          %p241 = pneg %p240
        $region38: #{tpu_custom_call.1} parent=27 // pred_check_branch
          %243 = sbr.rel (%p241) target = $region40
        $region39: #{tpu_custom_call.1} parent=27 // pred_region
          %244 = vst [vmem:[%s231] sm:$0xff] 0.0
        $region40: #{tpu_custom_call.1} parent=27 // pred_fallthru
          _
        %v245 = vld [vmem:[%s197] sm:$0xff]
        %v246 = vld [vmem:[%s197 + $0x8] sm:$0xff]
        %v247 = vld [vmem:[%s197 + $0x10] sm:$0xff]
        %v248 = vld [vmem:[%s197 + $0x18] sm:$0xff]
        %v249 = vld [vmem:[%s197 + $0x20] sm:$0xff]
        %v250 = vld [vmem:[%s197 + $0x28] sm:$0xff]
        %v251 = vld [vmem:[%s206] sm:$0xff]
        %v252 = vld [vmem:[%s206 + $0x8] sm:$0xff]
        %v253 = vld [vmem:[%s206 + $0x10] sm:$0xff]
        %v254 = vld [vmem:[%s206 + $0x18] sm:$0xff]
        %v255 = vld [vmem:[%s206 + $0x20] sm:$0xff]
        %v256 = vld [vmem:[%s206 + $0x28] sm:$0xff]
        %v257 = vsub.f32 %v245, %v251
        %v258 = vsub.f32 %v246, %v252
        %v259 = vsub.f32 %v247, %v253
        %v260 = vsub.f32 %v248, %v254
        %v261 = vsub.f32 %v249, %v255
        %v262 = vsub.f32 %v250, %v256
        %v263 = vand.u32 2147483647, %v257
        %v264 = vand.u32 2147483647, %v258
        %v265 = vand.u32 2147483647, %v259
        %v266 = vand.u32 2147483647, %v260
        %v267 = vand.u32 2147483647, %v261
        %v268 = vand.u32 2147483647, %v262
        %s269 = sadd.s32 %s26, %s27
        %s270 = smul.u32 %s269, 48
        %s271 = ssub.s32 48, %s270
        %v272 = vlaneseq
        %v273 = vshrl.u32 %v272, 7
        %v274 = vadd.s32 %v273, 8
        %v275 = vadd.s32 %v273, 16
        %v276 = vadd.s32 %v273, 24
        %v277 = vadd.s32 %v273, 32
        %v278 = vadd.s32 %v273, 40
        %v279 = vstv %s271
        %vm280 = vcmp.lt.s32.totalorder %v273, %v279
        %vm281 = vcmp.lt.s32.totalorder %v274, %v279
        %vm282 = vcmp.lt.s32.totalorder %v275, %v279
        %vm283 = vcmp.lt.s32.totalorder %v276, %v279
        %vm284 = vcmp.lt.s32.totalorder %v277, %v279
        %vm285 = vcmp.lt.s32.totalorder %v278, %v279
        %v286 = vsel %vm280, %v263, 0.0
        %v287 = vsel %vm281, %v264, 0.0
        %v288 = vsel %vm282, %v265, 0.0
        %v289 = vsel %vm283, %v266, 0.0
        %v290 = vsel %vm284, %v267, 0.0
        %v291 = vsel %vm285, %v268, 0.0
        %v292 = vld [vmem:[%s231] sm:$0x1]
        %v293 = vadd.f32 %v286, %v287
        %v294 = vadd.f32 %v293, %v288
        %v295 = vadd.f32 %v294, %v289
        %v296 = vadd.f32 %v295, %v290
        %v297 = vadd.f32 %v296, %v291
        %v298 = vrot.slane %v297, 4
        %v299 = vadd.f32 %v297, %v298
        %v300 = vrot.slane %v299, 2
        %v301 = vadd.f32 %v299, %v300
        %v302 = vrot.slane %v301, 1
        %v303 = vadd.f32 %v301, %v302
        %v304 = vadd.f32 %v292, %v303
        %305 = vst [vmem:[%s231] sm:$0x1] %v304
        %s306 = sand.u32 %s106, 1
        %s307 = scalar_lea.sflag [#allocation4], %s306
        %s308 = sand.u32 %s106, 1
        %s309 = smul.addr %s308, 8
        %s310 = scalar_lea.vmem [#allocation7], %s309
        // Predicated region
        $region41: #{tpu_custom_call.1} parent=27 // pred_check
          %p311 = pneg %p116
        $region42: #{tpu_custom_call.1} parent=27 // pred_check_branch
          %313 = sbr.rel (%p311) target = $region44
        $region43: #{tpu_custom_call.1} parent=27 // pred_region
          %s315 = ssub.s32 128, 128
          %316 = vsyncadd %s307, %s315
          %s317 = smul.addr %s26, 128
          %s318 = scalar_lea.hbm %s2, %s317
          %s320 = sshll.u32 %s310, 4
          %s321 = int_to_ptr.vmem [resolvable:$true] %s320
          %323 = dma.vmem_to_hbm [thread:$0]  %s321, 128, %s318, %s307
        $region44: #{tpu_custom_call.1} parent=27 // pred_fallthru
          _
      $region28: #{tpu_custom_call.1} parent=5 // pred_fallthru
        _
      %p324 = scmp.le.s32.totalorder 2, %s17
      // Predicated region
      $region45: #{tpu_custom_call.1} parent=5 // pred_check
        %p325 = pneg %p324
      $region46: #{tpu_custom_call.1} parent=5 // pred_check_branch
        %327 = sbr.rel (%p325) target = $region48
      $region47: #{tpu_custom_call.1} parent=5 // pred_region
        %s328 = ssub.s32 %s17, 2
        // Predicated region
        $region49: #{tpu_custom_call.1} parent=47 // pred_check
          %p329 = pneg %p122
        $region50: #{tpu_custom_call.1} parent=47 // pred_check_branch
          %331 = sbr.rel (%p329) target = $region52
        $region51: #{tpu_custom_call.1} parent=47 // pred_region
          %s332 = sand.u32 %s107, 1
          %s333 = scalar_lea.sflag [#allocation4], %s332
          %s334 = sand.u32 %s107, 1
          %s335 = smul.addr %s334, 8
          %s336 = scalar_lea.vmem [#allocation7], %s335
          %337 = dma.done %s333, 128
        $region52: #{tpu_custom_call.1} parent=47 // pred_fallthru
          _
      $region48: #{tpu_custom_call.1} parent=5 // pred_fallthru
        _
    $region6: #{tpu_custom_call.1} parent=1 // loop_footer
      %s21 = sadd.s32 1, %s17
    $region7: #{tpu_custom_call.1} parent=1 // loop_footer_branch
      %16 = sbr.rel target = $region3
    $region8: #{tpu_custom_call.1} parent=1 // loop_exit
      _
    %338 = vsyncpa [#allocation3], 1
    %s339 = scalar_lea.sflag [#allocation3], 1
    %340 = vsyncpa %s339, 1
    %341 = vsyncpa [#allocation6], 1
    %s342 = scalar_lea.sflag [#allocation6], 1
    %343 = vsyncpa %s342, 1
    %344 = vsyncpa [#allocation4], 1
    %s345 = scalar_lea.sflag [#allocation4], 1
    %346 = vsyncpa %s345, 1

</llo_original>
